<compile_context>
chip_gen: v7x
topology: tpu7x:2x2x1
jax: 0.10.0
libtpu: 0.0.40
codegen_flags: <defaults>
</compile_context>

<pallas_src>
import functools

import jax
import jax.numpy as jnp
from jax.experimental import pallas as pl
from jax.experimental.pallas import tpu as pltpu


# ----------------------------------------------------------------------------
# small helpers
# ----------------------------------------------------------------------------
def _gelu(x):
    # exact (erf) GELU, matching torch.nn.GELU()
    return jax.nn.gelu(x, approximate=False)


def _ln(x, g, b, eps=1e-5):
    mu = jnp.mean(x, axis=-1, keepdims=True)
    var = jnp.mean(jnp.square(x - mu), axis=-1, keepdims=True)
    return (x - mu) * jax.lax.rsqrt(var + eps) * g + b


def _block_per_batch(shape):
    rest = tuple(shape[1:])
    zeros = (0,) * len(rest)
    return pl.BlockSpec((1,) + rest, lambda b: (b,) + zeros)


def _block_shared(shape):
    zeros = (0,) * len(shape)
    return pl.BlockSpec(tuple(shape), lambda b: zeros)


# ----------------------------------------------------------------------------
# generic row-tiled linear (and linear + LayerNorm) kernels
# ----------------------------------------------------------------------------
def _linear_kernel(x_ref, w_ref, b_ref, o_ref):
    o_ref[0] = (jnp.dot(x_ref[0], w_ref[...], preferred_element_type=jnp.float32)
                + b_ref[...]).astype(o_ref.dtype)


def linear_pallas(x, w, b, block_rows=512):
    # x: [B, M, Din], w: [Din, Dout], b: [1, Dout]
    B, M, Din = x.shape
    Dout = w.shape[1]
    bm = M if M <= block_rows else block_rows
    return pl.pallas_call(
        _linear_kernel,
        out_shape=jax.ShapeDtypeStruct((B, M, Dout), x.dtype),
        grid=(B, pl.cdiv(M, bm)),
        in_specs=[pl.BlockSpec((1, bm, Din), lambda b, m: (b, m, 0)),
                  pl.BlockSpec((Din, Dout), lambda b, m: (0, 0)),
                  pl.BlockSpec((1, Dout), lambda b, m: (0, 0))],
        out_specs=pl.BlockSpec((1, bm, Dout), lambda b, m: (b, m, 0)),
        compiler_params=pltpu.CompilerParams(
            dimension_semantics=("parallel", "parallel")),
    )(x, w, b)


def _linear_ln_kernel(x_ref, w_ref, g_ref, b_ref, o_ref):
    y = jnp.dot(x_ref[0], w_ref[...], preferred_element_type=jnp.float32)
    o_ref[0] = _ln(y, g_ref[...], b_ref[...]).astype(o_ref.dtype)


def linear_ln_pallas(x, w, g, b, block_rows=512):
    # bias-free linear followed by LayerNorm over output features (edge_embedding path)
    B, M, Din = x.shape
    Dout = w.shape[1]
    bm = M if M <= block_rows else block_rows
    return pl.pallas_call(
        _linear_ln_kernel,
        out_shape=jax.ShapeDtypeStruct((B, M, Dout), x.dtype),
        grid=(B, pl.cdiv(M, bm)),
        in_specs=[pl.BlockSpec((1, bm, Din), lambda b, m: (b, m, 0)),
                  pl.BlockSpec((Din, Dout), lambda b, m: (0, 0)),
                  pl.BlockSpec((1, Dout), lambda b, m: (0, 0)),
                  pl.BlockSpec((1, Dout), lambda b, m: (0, 0))],
        out_specs=pl.BlockSpec((1, bm, Dout), lambda b, m: (b, m, 0)),
        compiler_params=pltpu.CompilerParams(
            dimension_semantics=("parallel", "parallel")),
    )(x, w, g, b)


# ----------------------------------------------------------------------------
# Fused encoder kernel: W_e + all EncLayers, one grid step per batch element.
# Edge tensors are K-major 2D inside the kernel: row (k*L + i) == edge (i, k).
# ----------------------------------------------------------------------------
_LAYER_PARAM_NAMES = ["W1", "b1", "W2", "b2", "W3", "b3",
                      "W11", "b11", "W12", "b12", "W13", "b13",
                      "Wi", "bi", "Wo", "bo",
                      "g1", "be1", "g2", "be2", "g3", "be3"]


def _encoder_kernel(n_layers, K, L, H, scale,
                    e_ref, eidx_ref, hv0_ref, mv_ref, ma_ref,
                    we_ref, be_ref,
                    W1s, b1s, W2s, b2s, W3s, b3s,
                    W11s, b11s, W12s, b12s, W13s, b13s,
                    Wis, bis, Wos, bos,
                    g1s, be1s, g2s, be2s, g3s, be3s,
                    hv_out, he_out):
    f32 = jnp.float32
    dot = lambda a, c: jnp.dot(a, c, preferred_element_type=f32)
    KL = K * L
    inv_scale = 1.0 / scale

    # Neighbor-gather one-hot built in-kernel from E_idx (K-major): no [B, KL, L]
    # HBM operand / DMA; gather_nodes(h, E_idx) == one_hot @ h (exact, 0/1 values).
    nbr_idx = eidx_ref[0]                                        # [KL, 1] int32
    cols = jax.lax.broadcasted_iota(jnp.int32, (KL, L), 1)
    one_hot = (nbr_idx == cols).astype(f32)                      # [KL, L]

    mask_v = mv_ref[0]                                           # [L, 1]
    mask_a = ma_ref[0]                                           # [KL, 1]

    # fused W_e: edge features -> hidden
    h_e = dot(e_ref[0], we_ref[...]) + be_ref[...]               # [KL, H]
    h_v = hv0_ref[0].astype(f32)                                 # [L, H]

    for l in range(n_layers):                                    # static unrolled
        W1 = W1s[l]                                              # [3H, H]
        W11 = W11s[l]

        # ---- node message MLP.  W1 row blocks follow the torch concat order
        #      [h_V_expand | h_E | gather_nodes(h_V)]; distributing W1 over the
        #      concat projects the node terms at [L, H] (K-fold fewer FLOPs) and
        #      avoids materializing the [KL, 3H] concat. ----
        p_edge = dot(h_e, W1[H:2 * H, :])                        # [KL, H]
        p_self = dot(h_v, W1[0:H, :])                            # [L, H]
        p_nbr = dot(one_hot, dot(h_v, W1[2 * H:3 * H, :]))       # [KL, H]
        msg = p_edge + p_nbr + jnp.concatenate([p_self] * K, axis=0) + b1s[l]
        msg = _gelu(msg)
        msg = _gelu(dot(msg, W2s[l]) + b2s[l])
        msg = dot(msg, W3s[l]) + b3s[l]
        msg = msg * mask_a                                       # mask_attend
        # pool over K neighbors: sum of K static row-blocks (K-major layout)
        dh = msg[0:L]
        for k in range(1, K):
            dh = dh + msg[k * L:(k + 1) * L]
        h_v = _ln(h_v + dh * inv_scale, g1s[l], be1s[l])         # dropout1 = identity

        # ---- position-wise feed-forward ----
        ff = dot(_gelu(dot(h_v, Wis[l]) + bis[l]), Wos[l]) + bos[l]
        h_v = _ln(h_v + ff, g2s[l], be2s[l])                     # dropout2 = identity
        h_v = mask_v * h_v                                       # mask_V

        # ---- edge update MLP (same distributed-concat trick) ----
        q_edge = dot(h_e, W11[H:2 * H, :])
        q_self = dot(h_v, W11[0:H, :])
        q_nbr = dot(one_hot, dot(h_v, W11[2 * H:3 * H, :]))
        upd = q_edge + q_nbr + jnp.concatenate([q_self] * K, axis=0) + b11s[l]
        upd = _gelu(upd)
        upd = _gelu(dot(upd, W12s[l]) + b12s[l])
        upd = dot(upd, W13s[l]) + b13s[l]
        h_e = _ln(h_e + upd, g3s[l], be3s[l])                    # dropout3 = identity

    hv_out[0] = h_v.astype(hv_out.dtype)
    he_out[0] = h_e.astype(he_out.dtype)


def encoder_layers_pallas(E_emb, eidx_km, h_v0, mask_v, mask_a, params,
                          K, L, H, scale=30.0):
    B = E_emb.shape[0]
    KL = K * L
    layers = params["layers"]
    n_layers = len(layers)
    stacked = [jnp.stack([lp[name] for lp in layers], axis=0)
               for name in _LAYER_PARAM_NAMES]

    inputs = [E_emb, eidx_km, h_v0, mask_v, mask_a,
              params["W_e_W"], params["W_e_b"]] + stacked
    in_specs = ([_block_per_batch(a.shape) for a in inputs[:5]]
                + [_block_shared(a.shape) for a in inputs[5:]])

    out_shape = (jax.ShapeDtypeStruct((B, L, H), jnp.float32),
                 jax.ShapeDtypeStruct((B, KL, H), jnp.float32))
    out_specs = (_block_per_batch((B, L, H)), _block_per_batch((B, KL, H)))

    kernel = functools.partial(_encoder_kernel, n_layers, K, L, H, float(scale))
    return pl.pallas_call(
        kernel,
        out_shape=out_shape,
        grid=(B,),
        in_specs=in_specs,
        out_specs=out_specs,
        compiler_params=pltpu.CompilerParams(dimension_semantics=("parallel",)),
    )(*inputs)


# ----------------------------------------------------------------------------
# ProteinFeatures featurization (plain-JAX glue + Pallas edge_embedding).
# TODO(synk): ProteinFeatures source not in the spec; this is the standard
# ProteinMPNN featurization (top-k Ca neighbors, 25x16 RBFs, relative-position
# embedding, edge_embedding + LayerNorm); augment_eps noise skipped.
# ----------------------------------------------------------------------------
_ATOM_IDX = {"N": 0, "Ca": 1, "C": 2, "O": 3, "Cb": 4}
_ATOM_PAIRS = [("Ca", "Ca"), ("N", "N"), ("C", "C"), ("O", "O"), ("Cb", "Cb"),
               ("Ca", "N"), ("Ca", "C"), ("Ca", "O"), ("Ca", "Cb"), ("N", "C"),
               ("N", "O"), ("N", "Cb"), ("Cb", "C"), ("Cb", "O"), ("O", "C"),
               ("N", "Ca"), ("C", "Ca"), ("O", "Ca"), ("Cb", "Ca"), ("C", "N"),
               ("O", "N"), ("Cb", "N"), ("C", "Cb"), ("O", "Cb"), ("C", "O")]


def _rbf(D, num_rbf=16, d_min=2.0, d_max=22.0):
    mu = jnp.linspace(d_min, d_max, num_rbf)
    sigma = (d_max - d_min) / num_rbf
    return jnp.exp(-jnp.square((D[..., None] - mu) / sigma))


def protein_features(X, mask, residue_idx, chain_labels, fp, top_k,
                     num_rbf=16, max_rel=32):
    B, L = X.shape[0], X.shape[1]
    N, Ca, C, O = X[:, :, 0], X[:, :, 1], X[:, :, 2], X[:, :, 3]
    bv, cv = Ca - N, C - Ca
    Cb = -0.58273431 * jnp.cross(bv, cv) + 0.56802827 * bv - 0.54067466 * cv + Ca
    atoms = jnp.stack([N, Ca, C, O, Cb], axis=2)                       # [B, L, 5, 3]

    # top-k neighbors from the single masked Ca-Ca distance matrix
    mask_2d = mask[:, :, None] * mask[:, None, :]
    d_ca = jnp.sqrt(jnp.sum(jnp.square(Ca[:, :, None] - Ca[:, None, :]), -1) + 1e-6)
    D = mask_2d * d_ca
    d_adj = D + (1.0 - mask_2d) * jnp.max(D, axis=-1, keepdims=True)
    k = min(top_k, L)
    _, E_idx = jax.lax.top_k(-d_adj, k)
    E_idx = E_idx.astype(jnp.int32)

    # gather K neighbor coordinates once; all 25 atom-pair distances on [B, L, K]
    atoms_nbr = jax.vmap(lambda a, idx: a[idx])(atoms, E_idx)          # [B, L, K, 5, 3]
    rbf_all = []
    for a_name, b_name in _ATOM_PAIRS:
        ai, bi = _ATOM_IDX[a_name], _ATOM_IDX[b_name]
        d_ab = jnp.sqrt(jnp.sum(jnp.square(
            atoms[:, :, ai][:, :, None, :] - atoms_nbr[:, :, :, bi, :]), -1) + 1e-6)
        rbf_all.append(_rbf(d_ab, num_rbf=num_rbf))
    RBF_all = jnp.concatenate(rbf_all, axis=-1)                        # [B, L, K, 25*num_rbf]

    # relative positional / chain embedding
    offset = residue_idx[:, :, None] - residue_idx[:, None, :]
    offset_nb = jnp.take_along_axis(offset, E_idx, axis=2)             # [B, L, K]
    same_chain = (chain_labels[:, :, None] == chain_labels[:, None, :]).astype(jnp.int32)
    e_chain = jnp.take_along_axis(same_chain, E_idx, axis=2)
    d_pos = jnp.clip(offset_nb + max_rel, 0, 2 * max_rel) * e_chain \
        + (1 - e_chain) * (2 * max_rel + 1)
    d_onehot = jax.nn.one_hot(d_pos, 2 * max_rel + 2, dtype=jnp.float32)
    E_pos = jnp.dot(d_onehot, fp["pos_W"]) + fp["pos_b"]               # [B, L, K, num_pos]

    E_cat = jnp.concatenate([E_pos, RBF_all], axis=-1)                 # [B, L, K, edge_in]
    # K-major flattening: row (k*L + i) == edge (node i, neighbor k)
    E_km = jnp.transpose(E_cat, (0, 2, 1, 3)).reshape(B, k * L, E_cat.shape[-1])
    # edge_embedding (bias-free) + LayerNorm, fused and row-tiled
    E_emb = linear_ln_pallas(E_km, fp["edge_W"], fp["norm_e_g"], fp["norm_e_b"])
    return E_emb, E_idx


# ----------------------------------------------------------------------------
# MPNNEncoder forward
# ----------------------------------------------------------------------------
def mpnn_encoder_forward(params, X, mask, prev_tokens,
                         residue_idx=None, chain_idx=None,
                         top_k=4, encoder_only=True):
    B, L = X.shape[0], X.shape[1]
    if residue_idx is None:
        residue_idx = jnp.broadcast_to(jnp.arange(L, dtype=jnp.int32)[None], (B, L))
    if chain_idx is None:
        chain_idx = jnp.ones((B, L), dtype=jnp.int32)

    E_emb, E_idx = protein_features(X, mask, residue_idx, chain_idx,
                                    params["feat"], top_k)
    K = E_idx.shape[-1]
    H = params["W_e_W"].shape[1]

    # masks / indices in K-major edge layout
    mask_nbr = jax.vmap(lambda m, idx: m[idx])(mask, E_idx)            # gather_nodes(mask)
    mask_attend = mask[:, :, None] * mask_nbr                          # [B, L, K]
    mask_a = jnp.transpose(mask_attend, (0, 2, 1)).reshape(B, K * L, 1)
    mask_v = mask[:, :, None]
    eidx_km = jnp.transpose(E_idx, (0, 2, 1)).reshape(B, K * L, 1)

    if encoder_only:
        h_v0 = params["token_embed"][prev_tokens]                      # token_embed lookup
    else:
        h_v0 = jnp.zeros((B, L, H), jnp.float32)

    # W_e + all encoder layers fused in one pallas_call; h_V / h_E VMEM-resident
    h_v, h_e_km = encoder_layers_pallas(E_emb, eidx_km, h_v0, mask_v, mask_a,
                                        params, K=K, L=L, H=H)

    if encoder_only:
        h_v = linear_pallas(h_v, params["W_out_W"], params["W_out_b"])  # [B, L, 2H]

    edge_feats = jnp.transpose(h_e_km.reshape(B, K, L, H), (0, 2, 1, 3))  # [B, L, K, H]
    return {"node_feats": h_v, "edge_feats": edge_feats, "edge_idx": E_idx}


# ----------------------------------------------------------------------------
# Deterministic synthetic parameters
# ----------------------------------------------------------------------------
def init_params(key, hidden=128, edge_features=128, n_layers=3, n_vocab=23,
                num_pos=16, num_rbf=16):
    H = hidden
    edge_in = num_pos + num_rbf * 25
    keys = iter(jax.random.split(key, 256))

    def mat(shape, scale=None):
        s = (1.0 / shape[0]) ** 0.5 if scale is None else scale
        return jax.random.normal(next(keys), shape, jnp.float32) * s

    def vec(n):
        return jnp.zeros((1, n), jnp.float32)

    def ones(n):
        return jnp.ones((1, n), jnp.float32)

    feat = {"pos_W": mat((2 * 32 + 2, num_pos)),
            "pos_b": jnp.zeros((num_pos,), jnp.float32),
            "edge_W": mat((edge_in, edge_features)),
            "norm_e_g": ones(edge_features),
            "norm_e_b": vec(edge_features)}

    layers = []
    for _ in range(n_layers):
        layers.append({
            "W1": mat((3 * H, H)), "b1": vec(H),
            "W2": mat((H, H)), "b2": vec(H),
            "W3": mat((H, H)), "b3": vec(H),
            "W11": mat((3 * H, H)), "b11": vec(H),
            "W12": mat((H, H)), "b12": vec(H),
            "W13": mat((H, H)), "b13": vec(H),
            "Wi": mat((H, 4 * H)), "bi": vec(4 * H),
            "Wo": mat((4 * H, H)), "bo": vec(H),
            "g1": ones(H), "be1": vec(H),
            "g2": ones(H), "be2": vec(H),
            "g3": ones(H), "be3": vec(H),
        })

    return {"feat": feat,
            "layers": layers,
            "W_e_W": mat((edge_features, H)), "W_e_b": vec(H),
            "token_embed": mat((n_vocab, H), scale=1.0),
            "W_out_W": mat((H, 2 * H)), "W_out_b": vec(2 * H)}


# ----------------------------------------------------------------------------
if __name__ == "__main__":
    # hidden = 128 (the ProteinMPNN default) keeps every matmul N-dim and output
    # store lane-dense (multiple of 128).  L is a multiple of 8 (sublane tile).
    B, L, K, H = 2, 8, 4, 128
    key = jax.random.PRNGKey(0)
    k_params, k_X, k_tok = jax.random.split(key, 3)

    params = init_params(k_params, hidden=H, edge_features=H, n_layers=3, n_vocab=23)

    X = jax.random.normal(k_X, (B, L, 4, 3), jnp.float32) * 3.0       # backbone coords
    mask = jnp.ones((B, L), jnp.float32).at[1, L - 1].set(0.0)        # one padded residue
    prev_tokens = jax.random.randint(k_tok, (B, L), 0, 23, dtype=jnp.int32)

    out = mpnn_encoder_forward(params, X, mask, prev_tokens, top_k=K, encoder_only=True)
    jax.block_until_ready(out)

    assert out["node_feats"].shape == (B, L, 2 * H)
    assert out["edge_feats"].shape == (B, L, K, H)
    assert out["edge_idx"].shape == (B, L, K)
    assert bool(jnp.all(jnp.isfinite(out["node_feats"])))
    assert bool(jnp.all(jnp.isfinite(out["edge_feats"])))
    print("KERNEL_OK")
</pallas_src>

<mosaic_0001>
module attributes {stable_mosaic.version = 11 : i64} {
  func.func @_linear_ln_kernel(%arg0: i32, %arg1: i32, %arg2: memref<1x32x416xf32, #tpu.memory_space<vmem>>, %arg3: memref<416x128xf32, #tpu.memory_space<vmem>>, %arg4: memref<1x128xf32, #tpu.memory_space<vmem>>, %arg5: memref<1x128xf32, #tpu.memory_space<vmem>>, %arg6: memref<1x32x128xf32, #tpu.memory_space<vmem>>) attributes {dimension_semantics = [#tpu.dimension_semantics<parallel>, #tpu.dimension_semantics<parallel>], iteration_bounds = array<i64: 2, 1>, scalar_prefetch = 0 : i64, scratch_operands = 0 : i64, tpu.core_type = #tpu.core_type<tc>, window_params = [{transform_indices = @transform_0, window_bounds = array<i64: 1, 32, 416>}, {pipeline_mode = #tpu.pipeline_mode<synchronous>, transform_indices = @transform_1, window_bounds = array<i64: 416, 128>}, {pipeline_mode = #tpu.pipeline_mode<synchronous>, transform_indices = @transform_2, window_bounds = array<i64: 1, 128>}, {pipeline_mode = #tpu.pipeline_mode<synchronous>, transform_indices = @transform_3, window_bounds = array<i64: 1, 128>}, {transform_indices = @transform_4, window_bounds = array<i64: 1, 32, 128>}]} {
    %c0 = arith.constant 0 : index
    %c0_0 = arith.constant 0 : index
    %c0_1 = arith.constant 0 : index
    %0 = vector.load %arg2[%c0, %c0_0, %c0_1] : memref<1x32x416xf32, #tpu.memory_space<vmem>>, vector<1x32x416xf32>
    %1 = vector.shape_cast %0 : vector<1x32x416xf32> to vector<32x416xf32>
    %c0_2 = arith.constant 0 : index
    %c0_3 = arith.constant 0 : index
    %2 = vector.load %arg3[%c0_2, %c0_3] : memref<416x128xf32, #tpu.memory_space<vmem>>, vector<416x128xf32>
    %cst = arith.constant dense<0.000000e+00> : vector<32x128xf32>
    %3 = tpu.matmul %1, %2, %cst {dimension_numbers = #tpu.dot_dimension_numbers<[1], [0], [0], [1], [0, 0, 1, 1], [], []>} : vector<32x416xf32>, vector<416x128xf32>, vector<32x128xf32> -> vector<32x128xf32>
    %c0_4 = arith.constant 0 : index
    %c0_5 = arith.constant 0 : index
    %4 = vector.load %arg4[%c0_4, %c0_5] : memref<1x128xf32, #tpu.memory_space<vmem>>, vector<1x128xf32>
    %c0_6 = arith.constant 0 : index
    %c0_7 = arith.constant 0 : index
    %5 = vector.load %arg5[%c0_6, %c0_7] : memref<1x128xf32, #tpu.memory_space<vmem>>, vector<1x128xf32>
    %cst_8 = arith.constant dense<0.000000e+00> : vector<32xf32>
    %6 = vector.multi_reduction <add>, %3, %cst_8 [1] : vector<32x128xf32> to vector<32xf32>
    %7 = vector.shape_cast %6 : vector<32xf32> to vector<32x1xf32>
    %cst_9 = arith.constant 1.280000e+02 : f32
    %8 = vector.broadcast %cst_9 : f32 to vector<32x1xf32>
    %9 = arith.divf %7, %8 : vector<32x1xf32>
    %10 = vector.broadcast %9 : vector<32x1xf32> to vector<32x128xf32>
    %11 = arith.subf %3, %10 : vector<32x128xf32>
    %12 = arith.mulf %11, %11 : vector<32x128xf32>
    %cst_10 = arith.constant dense<0.000000e+00> : vector<32xf32>
    %13 = vector.multi_reduction <add>, %12, %cst_10 [1] : vector<32x128xf32> to vector<32xf32>
    %14 = vector.shape_cast %13 : vector<32xf32> to vector<32x1xf32>
    %cst_11 = arith.constant 1.280000e+02 : f32
    %15 = vector.broadcast %cst_11 : f32 to vector<32x1xf32>
    %16 = arith.divf %14, %15 : vector<32x1xf32>
    %17 = vector.broadcast %9 : vector<32x1xf32> to vector<32x128xf32>
    %18 = arith.subf %3, %17 : vector<32x128xf32>
    %cst_12 = arith.constant 9.99999974E-6 : f32
    %19 = vector.broadcast %cst_12 : f32 to vector<32x1xf32>
    %20 = arith.addf %16, %19 : vector<32x1xf32>
    %21 = math.rsqrt %20 : vector<32x1xf32>
    %22 = vector.broadcast %21 : vector<32x1xf32> to vector<32x128xf32>
    %23 = arith.mulf %18, %22 : vector<32x128xf32>
    %24 = vector.broadcast %4 : vector<1x128xf32> to vector<32x128xf32>
    %25 = arith.mulf %23, %24 : vector<32x128xf32>
    %26 = vector.broadcast %5 : vector<1x128xf32> to vector<32x128xf32>
    %27 = arith.addf %25, %26 : vector<32x128xf32>
    %c0_13 = arith.constant 0 : index
    %c0_14 = arith.constant 0 : index
    %c0_15 = arith.constant 0 : index
    %28 = vector.load %arg6[%c0_13, %c0_14, %c0_15] : memref<1x32x128xf32, #tpu.memory_space<vmem>>, vector<1x32x128xf32>
    %29 = vector.shape_cast %28 : vector<1x32x128xf32> to vector<32x128xf32>
    %30 = vector.shape_cast %27 : vector<32x128xf32> to vector<1x32x128xf32>
    tpu.vector_store %arg6[%c0_13, %c0_14, %c0_15], %30 {strides = array<i32>} : memref<1x32x128xf32, #tpu.memory_space<vmem>>, vector<1x32x128xf32>,
    return
  }
  func.func @transform_0(%arg0: i32, %arg1: i32) -> (i32, i32, i32) {
    %c0_i32 = arith.constant 0 : i32
    %c0_i32_0 = arith.constant 0 : i32
    return %arg0, %arg1, %c0_i32 : i32, i32, i32
  }
  func.func @transform_1(%arg0: i32, %arg1: i32) -> (i32, i32) {
    %c0_i32 = arith.constant 0 : i32
    %c0_i32_0 = arith.constant 0 : i32
    %c0_i32_1 = arith.constant 0 : i32
    return %c0_i32, %c0_i32_0 : i32, i32
  }
  func.func @transform_2(%arg0: i32, %arg1: i32) -> (i32, i32) {
    %c0_i32 = arith.constant 0 : i32
    %c0_i32_0 = arith.constant 0 : i32
    %c0_i32_1 = arith.constant 0 : i32
    return %c0_i32, %c0_i32_0 : i32, i32
  }
  func.func @transform_3(%arg0: i32, %arg1: i32) -> (i32, i32) {
    %c0_i32 = arith.constant 0 : i32
    %c0_i32_0 = arith.constant 0 : i32
    %c0_i32_1 = arith.constant 0 : i32
    return %c0_i32, %c0_i32_0 : i32, i32
  }
  func.func @transform_4(%arg0: i32, %arg1: i32) -> (i32, i32, i32) {
    %c0_i32 = arith.constant 0 : i32
    %c0_i32_0 = arith.constant 0 : i32
    return %arg0, %arg1, %c0_i32 : i32, i32, i32
  }
}

</mosaic_0001>

<llo_original>
// kernel: tpu_custom_call.1
$region0: #{tpu_custom_call.1}
  #allocation0 [shape = 'u32[]', space=smem, size = 0x4, offset = 0x4, fixed_abs, tag = 'smem constant byte address 0x4 - core index']
  #allocation1 [shape = 'u32[144,128]{1,0:T(1,128)}', space=vmem, size = 0x12000, scoped, tag = 'internal scratch']
  %s0 = inlined_call_operand.hbm [shape: f32[2,32,416], index: 0, kind: input, shape index: {}]
  %s1 = inlined_call_operand.hbm [shape: f32[416,128], index: 1, kind: input, shape index: {}]
  %s2 = inlined_call_operand.vmem [shape: f32[1,128], index: 2, kind: input, shape index: {}]
  %s3 = inlined_call_operand.vmem [shape: f32[1,128], index: 3, kind: input, shape index: {}]
  %s4 = inlined_call_operand.hbm [shape: f32[2,32,128], index: 4, kind: output, shape index: {}]
  %s5 = sld [smem:[#allocation0]]
  $region57: #{tpu_custom_call.1} parent=0
    _
  %s7 = ssub.s32 1, %s5
  %s8 = scalar_select 0, %s7, %s5
  $region1: #{tpu_custom_call.1} parent=0
    #allocation2 [shape = 'u8[131072]{0}', space=vmem, size = 0x20000, scoped, tag = 'input window, operand 0']
    #allocation3 [shape = 's32[2]{0}', space=sflag, size = 0x8, scoped, tag = 'scoped memory for tpu_custom_call.1']
    #allocation4 [shape = 's32[2]{0}', space=sflag, size = 0x8, scoped, tag = 'scoped memory for tpu_custom_call.1']
    #allocation5 [shape = 'u8[212992]{0}', space=vmem, size = 0x34000, scoped, tag = 'input window, operand 1, single buffered']
    #allocation6 [shape = 's32[1]{0}', space=sflag, size = 0x4, scoped, tag = 'scoped memory for tpu_custom_call.1']
    #allocation7 [shape = 'u8[32768]{0}', space=vmem, size = 0x8000, scoped, tag = 'output window, operand 0']
    %9 = vsyncpa [#allocation3], 0
    %s10 = scalar_lea.sflag [#allocation3], 1
    %11 = vsyncpa %s10, 0
    %12 = vsyncpa [#allocation6], 0
    %13 = vsyncpa [#allocation4], 0
    %s14 = scalar_lea.sflag [#allocation4], 1
    %15 = vsyncpa %s14, 0
    loop: start=0, step=1, limit=4
    $region2: #{tpu_custom_call.1} parent=1 // loop_pre_header
      _
    $region3: #{tpu_custom_call.1} parent=1 // loop_header
      %s17 = sphi 0, %s21
      %p18 = scmp.ge.s32.totalorder %s17, 4
      %s24 = sphi 0, %s36
      %s25 = sphi 0, %s32
      %s26 = sphi 0, %s24
      %s27 = sphi 0, %s25
      %s28 = sphi 0, %s26
      %s29 = sphi 0, %s27
      %s41 = sphi 0, %s43
      %s44 = sphi 0, %s41
      %s45 = sphi 0, %s44
      %s61 = sphi 0, %s45
      %s65 = sphi 0, %s65
      %s67 = sphi 0, %s65
      %s68 = sphi 0, %s67
      %s82 = sphi 0, %s68
      %s86 = sphi 0, %s86
      %s88 = sphi 0, %s86
      %s89 = sphi 0, %s88
      %s103 = sphi 0, %s89
      %s107 = sphi 0, %s107
      %s109 = sphi 0, %s107
      %s110 = sphi 0, %s109
      %s124 = sphi 0, %s110
      %s132 = sphi 0, %s134
      %s135 = sphi 0, %s132
      %s136 = sphi 0, %s135
      %s152 = sphi 0, %s136
    $region4: #{tpu_custom_call.1} parent=1 // loop_header_branch
      %20 = sbr.rel (%p18) target = $region8
    $region5: #{tpu_custom_call.1} parent=1 // loop_body
      %s22 = ssub.s32 %s17, 1
      %s23 = ssub.s32 %s17, 2
      %s30 = sadd.s32 1, %s25
      %p31 = scmp.ge.s32.totalorder %s30, 1
      %s32 = scalar_select %p31, 0, %s30
      %s33 = sadd.s32 1, %s24
      %s34 = scalar_select %p31, %s33, %s24
      %p35 = scmp.ge.s32.totalorder %s34, 2
      %s36 = scalar_select %p35, 0, %s34
      %s37 = ssub.s32 %s24, %s36
      %s38 = ssub.s32 %s25, %s32
      %s39 = sor.u32 %s37, %s38
      %p40 = scmp.eq.s32.totalorder %s39, 0
      %s42 = sadd.s32 %s41, 1
      %s43 = scalar_select %p40, %s41, %s42
      %p46 = pneg %p40
      %p47 = scmp.eq.s32.totalorder %s17, 1
      %p48 = por %p46, %p47
      %p49 = scmp.ne.s32.totalorder %s41, %s44
      %p50 = scmp.eq.s32.totalorder %s17, 0
      %p51 = por %p49, %p50
      %p52 = scmp.ne.s32.totalorder %s41, %s44
      %p53 = scmp.eq.s32.totalorder %s22, 1
      %p54 = por %p52, %p53
      %p55 = scmp.ne.s32.totalorder %s44, %s45
      %p56 = scmp.eq.s32.totalorder %s22, 0
      %p57 = por %p55, %p56
      %p58 = scmp.ne.s32.totalorder %s44, %s45
      %p59 = scmp.eq.s32.totalorder %s23, 1
      %p60 = por %p58, %p59
      %p62 = scmp.ne.s32.totalorder %s45, %s61
      %p63 = scmp.eq.s32.totalorder %s23, 0
      %p64 = por %p62, %p63
      %s66 = sadd.s32 %s65, 1
      %p69 = scmp.eq.s32.totalorder %s17, 1
      %p70 = scmp.ne.s32.totalorder %s65, %s67
      %p71 = scmp.eq.s32.totalorder %s17, 0
      %p72 = por %p70, %p71
      %p73 = scmp.ne.s32.totalorder %s65, %s67
      %p74 = scmp.eq.s32.totalorder %s22, 1
      %p75 = por %p73, %p74
      %p76 = scmp.ne.s32.totalorder %s67, %s68
      %p77 = scmp.eq.s32.totalorder %s22, 0
      %p78 = por %p76, %p77
      %p79 = scmp.ne.s32.totalorder %s67, %s68
      %p80 = scmp.eq.s32.totalorder %s23, 1
      %p81 = por %p79, %p80
      %p83 = scmp.ne.s32.totalorder %s68, %s82
      %p84 = scmp.eq.s32.totalorder %s23, 0
      %p85 = por %p83, %p84
      %s87 = sadd.s32 %s86, 1
      %p90 = scmp.eq.s32.totalorder %s17, 1
      %p91 = scmp.ne.s32.totalorder %s86, %s88
      %p92 = scmp.eq.s32.totalorder %s17, 0
      %p93 = por %p91, %p92
      %p94 = scmp.ne.s32.totalorder %s86, %s88
      %p95 = scmp.eq.s32.totalorder %s22, 1
      %p96 = por %p94, %p95
      %p97 = scmp.ne.s32.totalorder %s88, %s89
      %p98 = scmp.eq.s32.totalorder %s22, 0
      %p99 = por %p97, %p98
      %p100 = scmp.ne.s32.totalorder %s88, %s89
      %p101 = scmp.eq.s32.totalorder %s23, 1
      %p102 = por %p100, %p101
      %p104 = scmp.ne.s32.totalorder %s89, %s103
      %p105 = scmp.eq.s32.totalorder %s23, 0
      %p106 = por %p104, %p105
      %s108 = sadd.s32 %s107, 1
      %p111 = scmp.eq.s32.totalorder %s17, 1
      %p112 = scmp.ne.s32.totalorder %s107, %s109
      %p113 = scmp.eq.s32.totalorder %s17, 0
      %p114 = por %p112, %p113
      %p115 = scmp.ne.s32.totalorder %s107, %s109
      %p116 = scmp.eq.s32.totalorder %s22, 1
      %p117 = por %p115, %p116
      %p118 = scmp.ne.s32.totalorder %s109, %s110
      %p119 = scmp.eq.s32.totalorder %s22, 0
      %p120 = por %p118, %p119
      %p121 = scmp.ne.s32.totalorder %s109, %s110
      %p122 = scmp.eq.s32.totalorder %s23, 1
      %p123 = por %p121, %p122
      %p125 = scmp.ne.s32.totalorder %s110, %s124
      %p126 = scmp.eq.s32.totalorder %s23, 0
      %p127 = por %p125, %p126
      %s128 = ssub.s32 %s24, %s36
      %s129 = ssub.s32 %s25, %s32
      %s130 = sor.u32 %s128, %s129
      %p131 = scmp.eq.s32.totalorder %s130, 0
      %s133 = sadd.s32 %s132, 1
      %s134 = scalar_select %p131, %s132, %s133
      %p137 = pneg %p131
      %p138 = scmp.eq.s32.totalorder %s17, 1
      %p139 = por %p137, %p138
      %p140 = scmp.ne.s32.totalorder %s132, %s135
      %p141 = scmp.eq.s32.totalorder %s17, 0
      %p142 = por %p140, %p141
      %p143 = scmp.ne.s32.totalorder %s132, %s135
      %p144 = scmp.eq.s32.totalorder %s22, 1
      %p145 = por %p143, %p144
      %p146 = scmp.ne.s32.totalorder %s135, %s136
      %p147 = scmp.eq.s32.totalorder %s22, 0
      %p148 = por %p146, %p147
      %p149 = scmp.ne.s32.totalorder %s135, %s136
      %p150 = scmp.eq.s32.totalorder %s23, 1
      %p151 = por %p149, %p150
      %p153 = scmp.ne.s32.totalorder %s136, %s152
      %p154 = scmp.eq.s32.totalorder %s23, 0
      %p155 = por %p153, %p154
      %p156 = scmp.le.s32.totalorder 1, %s17
      %p157 = scmp.lt.s32.totalorder %s17, 3
      %p158 = pnand %p156, %p157
      %p159 = pneg %p158
      // Predicated region
      $region9: #{tpu_custom_call.1} parent=5 // pred_check
        _
      $region10: #{tpu_custom_call.1} parent=5 // pred_check_branch
        %161 = sbr.rel (%p158) target = $region12
      $region11: #{tpu_custom_call.1} parent=5 // pred_region
        %s162 = ssub.s32 %s17, 1
        // Predicated region
        $region13: #{tpu_custom_call.1} parent=11 // pred_check
          %p163 = pneg %p78
        $region14: #{tpu_custom_call.1} parent=11 // pred_check_branch
          %165 = sbr.rel (%p163) target = $region16
        $region15: #{tpu_custom_call.1} parent=11 // pred_region
          %s167 = ssub.s32 6656, 6656
          %168 = vsyncadd [#allocation6], %s167
          %s169 = sshll.u32 [#allocation5], 4
          %s170 = int_to_ptr.vmem [resolvable:$true] %s169
          %175 = dma.hbm_to_vmem [thread:$0]  %s1, 6656, %s170, [#allocation6], 128, 128, 8
        $region16: #{tpu_custom_call.1} parent=11 // pred_fallthru
          _
        // Predicated region
        $region17: #{tpu_custom_call.1} parent=11 // pred_check
          %p176 = pneg %p99
        $region18: #{tpu_custom_call.1} parent=11 // pred_check_branch
          %178 = sbr.rel (%p176) target = $region20
        $region19: #{tpu_custom_call.1} parent=11 // pred_region
          _
        $region20: #{tpu_custom_call.1} parent=11 // pred_fallthru
          _
        // Predicated region
        $region21: #{tpu_custom_call.1} parent=11 // pred_check
          %p179 = pneg %p120
        $region22: #{tpu_custom_call.1} parent=11 // pred_check_branch
          %181 = sbr.rel (%p179) target = $region24
        $region23: #{tpu_custom_call.1} parent=11 // pred_region
          _
        $region24: #{tpu_custom_call.1} parent=11 // pred_fallthru
          _
      $region12: #{tpu_custom_call.1} parent=5 // pred_fallthru
        _
      %p182 = scmp.lt.s32.totalorder %s17, 2
      // Predicated region
      $region25: #{tpu_custom_call.1} parent=5 // pred_check
        %p183 = pneg %p182
      $region26: #{tpu_custom_call.1} parent=5 // pred_check_branch
        %185 = sbr.rel (%p183) target = $region28
      $region27: #{tpu_custom_call.1} parent=5 // pred_region
        // Predicated region
        $region29: #{tpu_custom_call.1} parent=27 // pred_check
          %p186 = pneg %p51
        $region30: #{tpu_custom_call.1} parent=27 // pred_check_branch
          %188 = sbr.rel (%p186) target = $region32
        $region31: #{tpu_custom_call.1} parent=27 // pred_region
          %s189 = sand.u32 %s41, 1
          %s190 = scalar_lea.sflag [#allocation3], %s189
          %s191 = sand.u32 %s41, 1
          %s192 = smul.addr %s191, 128
          %s193 = scalar_lea.vmem [#allocation2], %s192
          %s194 = smul.u32 4, %s25
          %s196 = ssub.s32 2048, 2048
          %197 = vsyncadd %s190, %s196
          %s198 = smul.addr %s194, 4
          %s199 = smul.addr %s24, 16
          %s200 = sadd.s32 %s198, %s199
          %s201 = smul.addr %s200, 128
          %s202 = scalar_lea.hbm %s0, %s201
          %s203 = sshll.u32 %s193, 4
          %s204 = int_to_ptr.vmem [resolvable:$true] %s203
          %209 = dma.hbm_to_vmem [thread:$0]  %s202, 2048, %s204, %s190, 512, 512, 32
        $region32: #{tpu_custom_call.1} parent=27 // pred_fallthru
          _
      $region28: #{tpu_custom_call.1} parent=5 // pred_fallthru
        _
      %p210 = scmp.le.s32.totalorder 1, %s17
      %p211 = scmp.lt.s32.totalorder %s17, 3
      %p212 = pnand %p210, %p211
      %p213 = pneg %p212
      // Predicated region
      $region33: #{tpu_custom_call.1} parent=5 // pred_check
        _
      $region34: #{tpu_custom_call.1} parent=5 // pred_check_branch
        %215 = sbr.rel (%p212) target = $region36
      $region35: #{tpu_custom_call.1} parent=5 // pred_region
        %s216 = ssub.s32 %s17, 1
        %s217 = sand.u32 %s44, 1
        %s218 = scalar_lea.sflag [#allocation3], %s217
        %s219 = sand.u32 %s44, 1
        %s220 = smul.addr %s219, 128
        %s221 = scalar_lea.vmem [#allocation2], %s220
        // Predicated region
        $region37: #{tpu_custom_call.1} parent=35 // pred_check
          %p222 = pneg %p57
        $region38: #{tpu_custom_call.1} parent=35 // pred_check_branch
          %224 = sbr.rel (%p222) target = $region40
        $region39: #{tpu_custom_call.1} parent=35 // pred_region
          %225 = dma.done %s218, 2048
        $region40: #{tpu_custom_call.1} parent=35 // pred_fallthru
          _
        // Predicated region
        $region41: #{tpu_custom_call.1} parent=35 // pred_check
          %p226 = pneg %p78
        $region42: #{tpu_custom_call.1} parent=35 // pred_check_branch
          %228 = sbr.rel (%p226) target = $region44
        $region43: #{tpu_custom_call.1} parent=35 // pred_region
          %229 = dma.done [#allocation6], 6656
        $region44: #{tpu_custom_call.1} parent=35 // pred_fallthru
          _
        %s230 = sand.u32 %s44, 1
        %s231 = scalar_lea.sflag [#allocation3], %s230
        %s232 = sand.u32 %s44, 1
        %s233 = smul.addr %s232, 128
        %s234 = scalar_lea.vmem [#allocation2], %s233
        %p235 = pneg %p57
        %p236 = pneg %p54
        %p237 = pneg %p78
        %p238 = pneg %p75
        %p239 = pneg %p99
        %p240 = pneg %p96
        %p241 = pneg %p120
        %p242 = pneg %p117
        %p243 = pneg %p148
        %p244 = pneg %p145
        %s245 = sand.u32 %s135, 1
        %s246 = scalar_lea.sflag [#allocation4], %s245
        %s247 = sand.u32 %s135, 1
        %s248 = smul.addr %s247, 32
        %s249 = scalar_lea.vmem [#allocation7], %s248
        %s250 = smul.u32 4, %s27
        %s251 = smul.u32 4, %s27
        %v252 = vld [vmem:[%s221] sm:$0xff]
        %v253 = vld [vmem:[%s221 + $0x8] sm:$0xff]
        %v254 = vld [vmem:[%s221 + $0x10] sm:$0xff]
        %v255 = vld [vmem:[%s221 + $0x18] sm:$0xff]
        %v256 = vld [vmem:[%s221 + $0x20] sm:$0xff]
        %v257 = vld [vmem:[%s221 + $0x28] sm:$0xff]
        %v258 = vld [vmem:[%s221 + $0x30] sm:$0xff]
        %v259 = vld [vmem:[%s221 + $0x38] sm:$0xff]
        %v260 = vld [vmem:[%s221 + $0x40] sm:$0xff]
        %v261 = vld [vmem:[%s221 + $0x48] sm:$0xff]
        %v262 = vld [vmem:[%s221 + $0x50] sm:$0xff]
        %v263 = vld [vmem:[%s221 + $0x58] sm:$0xff]
        %v264 = vld [vmem:[%s221 + $0x60] sm:$0xff]
        %v265 = vld [vmem:[%s221 + $0x68] sm:$0xff]
        %v266 = vld [vmem:[%s221 + $0x70] sm:$0xff]
        %v267 = vld [vmem:[%s221 + $0x78] sm:$0xff]
        %v268 = vld [vmem:[#allocation5] sm:$0xff]
        %v269 = vld [vmem:[#allocation5 + $0x8] sm:$0xff]
        %v270 = vld [vmem:[#allocation5 + $0x10] sm:$0xff]
        %v271 = vld [vmem:[#allocation5 + $0x18] sm:$0xff]
        %v272 = vld [vmem:[#allocation5 + $0x20] sm:$0xff]
        %v273 = vld [vmem:[#allocation5 + $0x28] sm:$0xff]
        %v274 = vld [vmem:[#allocation5 + $0x30] sm:$0xff]
        %v275 = vld [vmem:[#allocation5 + $0x38] sm:$0xff]
        %v276 = vld [vmem:[#allocation5 + $0x40] sm:$0xff]
        %v277 = vld [vmem:[#allocation5 + $0x48] sm:$0xff]
        %v278 = vld [vmem:[#allocation5 + $0x50] sm:$0xff]
        %v279 = vld [vmem:[#allocation5 + $0x58] sm:$0xff]
        %v280 = vld [vmem:[#allocation5 + $0x60] sm:$0xff]
        %v281 = vld [vmem:[#allocation5 + $0x68] sm:$0xff]
        %v282 = vld [vmem:[#allocation5 + $0x70] sm:$0xff]
        %v283 = vld [vmem:[#allocation5 + $0x78] sm:$0xff]
        %v284 = vld [vmem:[#allocation5 + $0x80] sm:$0xff]
        %v285 = vld [vmem:[#allocation5 + $0x88] sm:$0xff]
        %v286 = vld [vmem:[#allocation5 + $0x90] sm:$0xff]
        %v287 = vld [vmem:[#allocation5 + $0x98] sm:$0xff]
        %v288 = vld [vmem:[#allocation5 + $0xa0] sm:$0xff]
        %v289 = vld [vmem:[#allocation5 + $0xa8] sm:$0xff]
        %v290 = vld [vmem:[#allocation5 + $0xb0] sm:$0xff]
        %v291 = vld [vmem:[#allocation5 + $0xb8] sm:$0xff]
        %v292 = vld [vmem:[#allocation5 + $0xc0] sm:$0xff]
        %v293 = vld [vmem:[#allocation5 + $0xc8] sm:$0xff]
        %v294 = vld [vmem:[#allocation5 + $0xd0] sm:$0xff]
        %v295 = vld [vmem:[#allocation5 + $0xd8] sm:$0xff]
        %v296 = vld [vmem:[#allocation5 + $0xe0] sm:$0xff]
        %v297 = vld [vmem:[#allocation5 + $0xe8] sm:$0xff]
        %v298 = vld [vmem:[#allocation5 + $0xf0] sm:$0xff]
        %v299 = vld [vmem:[#allocation5 + $0xf8] sm:$0xff]
        %v300 = vld [vmem:[#allocation5 + $0x100] sm:$0xff]
        %v301 = vld [vmem:[#allocation5 + $0x108] sm:$0xff]
        %v302 = vld [vmem:[#allocation5 + $0x110] sm:$0xff]
        %v303 = vld [vmem:[#allocation5 + $0x118] sm:$0xff]
        %v304 = vld [vmem:[#allocation5 + $0x120] sm:$0xff]
        %v305 = vld [vmem:[#allocation5 + $0x128] sm:$0xff]
        %v306 = vld [vmem:[#allocation5 + $0x130] sm:$0xff]
        %v307 = vld [vmem:[#allocation5 + $0x138] sm:$0xff]
        %v308 = vld [vmem:[#allocation5 + $0x140] sm:$0xff]
        %v309 = vld [vmem:[#allocation5 + $0x148] sm:$0xff]
        %v310 = vld [vmem:[#allocation5 + $0x150] sm:$0xff]
        %v311 = vld [vmem:[#allocation5 + $0x158] sm:$0xff]
        %v312 = vld [vmem:[#allocation5 + $0x160] sm:$0xff]
        %v313 = vld [vmem:[#allocation5 + $0x168] sm:$0xff]
        %v314 = vld [vmem:[#allocation5 + $0x170] sm:$0xff]
        %v315 = vld [vmem:[#allocation5 + $0x178] sm:$0xff]
        %v316 = vld [vmem:[#allocation5 + $0x180] sm:$0xff]
        %v317 = vld [vmem:[#allocation5 + $0x188] sm:$0xff]
        %v318 = vld [vmem:[#allocation5 + $0x190] sm:$0xff]
        %v319 = vld [vmem:[#allocation5 + $0x198] sm:$0xff]
        %vm320 = vcmask 261120
        %v322 = vsel %vm320, %v255, 0
        %v325 = vsel %vm320, %v259, 0
        %v328 = vsel %vm320, %v263, 0
        %v331 = vsel %vm320, %v267, 0
        %333 = vmatprep.subr.mxu0 0.0
        %334 = vmatpush1.msra.mxu0 %v268
        %335 = vmatprep.subr.mxu0 0.0
        %336 = vmatpush1.msra.mxu0 %v269
        %337 = vmatprep.subr.mxu0 0.0
        %338 = vmatpush1.msra.mxu0 %v270
        %339 = vmatprep.subr.mxu0 0.0
        %340 = vmatpush1.msra.mxu0 %v271
        %341 = vmatprep.subr.mxu0 0.0
        %342 = vmatpush1.msra.mxu0 %v272
        %343 = vmatprep.subr.mxu0 0.0
        %344 = vmatpush1.msra.mxu0 %v273
        %345 = vmatprep.subr.mxu0 0.0
        %346 = vmatpush1.msra.mxu0 %v274
        %347 = vmatprep.subr.mxu0 0.0
        %348 = vmatpush1.msra.mxu0 %v275
        %349 = vmatprep.subr.mxu0 0.0
        %350 = vmatpush1.msra.mxu0 %v276
        %351 = vmatprep.subr.mxu0 0.0
        %352 = vmatpush1.msra.mxu0 %v277
        %353 = vmatprep.subr.mxu0 0.0
        %354 = vmatpush1.msra.mxu0 %v278
        %355 = vmatprep.subr.mxu0 0.0
        %356 = vmatpush1.msra.mxu0 %v279
        %357 = vmatprep.subr.mxu0 0.0
        %358 = vmatpush1.msra.mxu0 %v280
        %359 = vmatprep.subr.mxu0 0.0
        %360 = vmatpush1.msra.mxu0 %v281
        %361 = vmatprep.subr.mxu0 0.0
        %362 = vmatpush1.msra.mxu0 %v282
        %363 = vmatprep.subr.mxu0 0.0
        %364 = vmatpush1.msra.mxu0 %v283
        %365 = vmatprep.subr.mxu0 0.0
        %366 = vmatpush1.msra.mxu0 %v284
        %367 = vmatprep.subr.mxu0 0.0
        %368 = vmatpush1.msra.mxu0 %v285
        %369 = vmatprep.subr.mxu0 0.0
        %370 = vmatpush1.msra.mxu0 %v286
        %371 = vmatprep.subr.mxu0 0.0
        %372 = vmatpush1.msra.mxu0 %v287
        %373 = vmatprep.subr.mxu0 0.0
        %374 = vmatpush1.msra.mxu0 %v288
        %375 = vmatprep.subr.mxu0 0.0
        %376 = vmatpush1.msra.mxu0 %v289
        %377 = vmatprep.subr.mxu0 0.0
        %378 = vmatpush1.msra.mxu0 %v290
        %379 = vmatprep.subr.mxu0 0.0
        %380 = vmatpush1.msra.mxu0 %v291
        %381 = vmatprep.subr.mxu0 0.0
        %382 = vmatpush1.msra.mxu0 %v292
        %383 = vmatprep.subr.mxu0 0.0
        %384 = vmatpush1.msra.mxu0 %v293
        %385 = vmatprep.subr.mxu0 0.0
        %386 = vmatpush1.msra.mxu0 %v294
        %387 = vmatprep.subr.mxu0 0.0
        %388 = vmatpush1.msra.mxu0 %v295
        %389 = vmatprep.subr.mxu0 0.0
        %390 = vmatpush1.msra.mxu0 %v296
        %391 = vmatprep.subr.mxu0 0.0
        %392 = vmatpush1.msra.mxu0 %v297
        %393 = vmatprep.subr.mxu0 0.0
        %394 = vmatpush1.msra.mxu0 %v298
        %395 = vmatprep.subr.mxu0 0.0
        %396 = vmatpush1.msra.mxu0 %v299
        %397 = vmatprep.mubr.f32.mxu0 %v253
        %398 = vmatmul.mubr.f32.gmra.mrb[0].mxu0 %v252
        %v399 = vpop.f32.mrb[0].mxu0
        %v400 = vadd.f32 0.0, %v399
        %v401 = vpop.f32.mrb[0].mxu0
        %402 = vmatprep.mubr.f32.mxu0 %v257
        %403 = vmatmul.mubr.f32.gmra.mrb[0].mxu0 %v256
        %v404 = vpop.f32.mrb[0].mxu0
        %v405 = vadd.f32 0.0, %v404
        %v406 = vpop.f32.mrb[0].mxu0
        %407 = vmatprep.mubr.f32.mxu0 %v261
        %408 = vmatmul.mubr.f32.gmra.mrb[0].mxu0 %v260
        %v409 = vpop.f32.mrb[0].mxu0
        %v410 = vadd.f32 0.0, %v409
        %v411 = vpop.f32.mrb[0].mxu0
        %412 = vmatprep.mubr.f32.mxu0 %v265
        %413 = vmatmul.mubr.f32.gmra.mrb[0].mxu0 %v264
        %v414 = vpop.f32.mrb[0].mxu0
        %v415 = vadd.f32 0.0, %v414
        %v416 = vpop.f32.mrb[0].mxu0
        %417 = vdwg.mxu0
        %418 = vmatprep.subr.mxu0 0.0
        %419 = vmatpush1.msra.mxu0 %v300
        %420 = vmatprep.subr.mxu0 0.0
        %421 = vmatpush1.msra.mxu0 %v301
        %422 = vmatprep.subr.mxu0 0.0
        %423 = vmatpush1.msra.mxu0 %v302
        %424 = vmatprep.subr.mxu0 0.0
        %425 = vmatpush1.msra.mxu0 %v303
        %426 = vmatprep.subr.mxu0 0.0
        %427 = vmatpush1.msra.mxu0 %v304
        %428 = vmatprep.subr.mxu0 0.0
        %429 = vmatpush1.msra.mxu0 %v305
        %430 = vmatprep.subr.mxu0 0.0
        %431 = vmatpush1.msra.mxu0 %v306
        %432 = vmatprep.subr.mxu0 0.0
        %433 = vmatpush1.msra.mxu0 %v307
        %434 = vmatprep.subr.mxu0 0.0
        %435 = vmatpush1.msra.mxu0 %v308
        %436 = vmatprep.subr.mxu0 0.0
        %437 = vmatpush1.msra.mxu0 %v309
        %438 = vmatprep.subr.mxu0 0.0
        %439 = vmatpush1.msra.mxu0 %v310
        %440 = vmatprep.subr.mxu0 0.0
        %441 = vmatpush1.msra.mxu0 %v311
        %442 = vmatprep.subr.mxu0 0.0
        %443 = vmatpush1.msra.mxu0 %v312
        %444 = vmatprep.subr.mxu0 0.0
        %445 = vmatpush1.msra.mxu0 %v313
        %446 = vmatprep.subr.mxu0 0.0
        %447 = vmatpush1.msra.mxu0 %v314
        %448 = vmatprep.subr.mxu0 0.0
        %449 = vmatpush1.msra.mxu0 %v315
        %450 = vmatprep.subr.mxu0 0.0
        %451 = vmatpush1.msra.mxu0 %v316
        %452 = vmatprep.subr.mxu0 0.0
        %453 = vmatpush1.msra.mxu0 %v317
        %454 = vmatprep.subr.mxu0 0.0
        %455 = vmatpush1.msra.mxu0 %v318
        %456 = vmatprep.subr.mxu0 0.0
        %457 = vmatpush1.msra.mxu0 %v319
        %458 = vmatprep.subr.mxu0 0.0
        %459 = vmatpush1.msra.mxu0 0.0
        %460 = vmatprep.subr.mxu0 0.0
        %461 = vmatpush1.msra.mxu0 0.0
        %462 = vmatprep.subr.mxu0 0.0
        %463 = vmatpush1.msra.mxu0 0.0
        %464 = vmatprep.subr.mxu0 0.0
        %465 = vmatpush1.msra.mxu0 0.0
        %466 = vmatprep.subr.mxu0 0.0
        %467 = vmatpush1.msra.mxu0 0.0
        %468 = vmatprep.subr.mxu0 0.0
        %469 = vmatpush1.msra.mxu0 0.0
        %470 = vmatprep.subr.mxu0 0.0
        %471 = vmatpush1.msra.mxu0 0.0
        %472 = vmatprep.subr.mxu0 0.0
        %473 = vmatpush1.msra.mxu0 0.0
        %474 = vmatprep.subr.mxu0 0.0
        %475 = vmatpush1.msra.mxu0 0.0
        %476 = vmatprep.subr.mxu0 0.0
        %477 = vmatpush1.msra.mxu0 0.0
        %478 = vmatprep.subr.mxu0 0.0
        %479 = vmatpush1.msra.mxu0 0.0
        %480 = vmatprep.subr.mxu0 0.0
        %481 = vmatpush1.msra.mxu0 0.0
        %482 = vmatprep.mubr.f32.mxu0 %v322
        %483 = vmatmul.mubr.f32.gmra.mrb[0].mxu0 %v254
        %v484 = vpop.f32.mrb[0].mxu0
        %v485 = vadd.f32 %v400, %v484
        %v486 = vpop.f32.mrb[0].mxu0
        %487 = vmatprep.mubr.f32.mxu0 %v325
        %488 = vmatmul.mubr.f32.gmra.mrb[0].mxu0 %v258
        %v489 = vpop.f32.mrb[0].mxu0
        %v490 = vadd.f32 %v405, %v489
        %v491 = vpop.f32.mrb[0].mxu0
        %492 = vmatprep.mubr.f32.mxu0 %v328
        %493 = vmatmul.mubr.f32.gmra.mrb[0].mxu0 %v262
        %v494 = vpop.f32.mrb[0].mxu0
        %v495 = vadd.f32 %v410, %v494
        %v496 = vpop.f32.mrb[0].mxu0
        %497 = vmatprep.mubr.f32.mxu0 %v331
        %498 = vmatmul.mubr.f32.gmra.mrb[0].mxu0 %v266
        %v499 = vpop.f32.mrb[0].mxu0
        %v500 = vadd.f32 %v415, %v499
        %v501 = vpop.f32.mrb[0].mxu0
        %502 = vdwg.mxu0
        %v503 = vld [vmem:[%s2] sm:$0x1]
        %v504 = vld [vmem:[%s3] sm:$0x1]
        %505 = vadd.xlane.f32.xlu0 %v485
        %v506 = vpop.xlane.xlu0 %505
        %507 = vadd.xlane.f32.xlu0 %v490
        %v508 = vpop.xlane.xlu0 %507
        %509 = vadd.xlane.f32.xlu0 %v495
        %v510 = vpop.xlane.xlu0 %509
        %511 = vadd.xlane.f32.xlu0 %v500
        %v512 = vpop.xlane.xlu0 %511
        %v513 = vrcp.pop 128.0
        %v514 = vmul.f32 %v506, %v513
        %v515 = vmul.f32 %v508, %v513
        %v516 = vmul.f32 %v510, %v513
        %v517 = vmul.f32 %v512, %v513
        %v518 = vsub.f32 %v485, %v514
        %v519 = vsub.f32 %v490, %v515
        %v520 = vsub.f32 %v495, %v516
        %v521 = vsub.f32 %v500, %v517
        %v522 = vmul.f32 %v518, %v518
        %v523 = vmul.f32 %v519, %v519
        %v524 = vmul.f32 %v520, %v520
        %v525 = vmul.f32 %v521, %v521
        %526 = vadd.xlane.f32.xlu0 %v522
        %v527 = vpop.xlane.xlu0 %526
        %528 = vadd.xlane.f32.xlu0 %v523
        %v529 = vpop.xlane.xlu0 %528
        %530 = vadd.xlane.f32.xlu0 %v524
        %v531 = vpop.xlane.xlu0 %530
        %532 = vadd.xlane.f32.xlu0 %v525
        %v533 = vpop.xlane.xlu0 %532
        %v534 = vmul.f32 %v527, %v513
        %v535 = vmul.f32 %v529, %v513
        %v536 = vmul.f32 %v531, %v513
        %v537 = vmul.f32 %v533, %v513
        %v538 = vadd.f32 %v534, 1e-05
        %v539 = vadd.f32 %v535, 1e-05
        %v540 = vadd.f32 %v536, 1e-05
        %v541 = vadd.f32 %v537, 1e-05
        %v542 = vrsqrt.pop %v538
        %v543 = vrsqrt.pop %v539
        %v544 = vrsqrt.pop %v540
        %v545 = vrsqrt.pop %v541
        %v546 = vmul.f32 %v518, %v542
        %v547 = vmul.f32 %v519, %v543
        %v548 = vmul.f32 %v520, %v544
        %v549 = vmul.f32 %v521, %v545
        %v551 = vlaneseq
        %v552 = vshrl.u32 %v551, 7
        %v553 = vsub.s32 0, %v552
        %v554 = vrot.slane %v503, %v553
        %v556 = vmul.f32 %v546, %v554
        %v557 = vmul.f32 %v547, %v554
        %v558 = vmul.f32 %v548, %v554
        %v559 = vmul.f32 %v549, %v554
        %v561 = vlaneseq
        %v562 = vshrl.u32 %v561, 7
        %v563 = vsub.s32 0, %v562
        %v564 = vrot.slane %v504, %v563
        %v566 = vadd.f32 %v556, %v564
        %v567 = vadd.f32 %v557, %v564
        %v568 = vadd.f32 %v558, %v564
        %v569 = vadd.f32 %v559, %v564
        %570 = vst [vmem:[%s249] sm:$0xff] %v566
        %571 = vst [vmem:[%s249 + $0x8] sm:$0xff] %v567
        %572 = vst [vmem:[%s249 + $0x10] sm:$0xff] %v568
        %573 = vst [vmem:[%s249 + $0x18] sm:$0xff] %v569
        %s574 = sand.u32 %s135, 1
        %s575 = scalar_lea.sflag [#allocation4], %s574
        %s576 = sand.u32 %s135, 1
        %s577 = smul.addr %s576, 32
        %s578 = scalar_lea.vmem [#allocation7], %s577
        // Predicated region
        $region45: #{tpu_custom_call.1} parent=35 // pred_check
          %p579 = pneg %p145
        $region46: #{tpu_custom_call.1} parent=35 // pred_check_branch
          %581 = sbr.rel (%p579) target = $region48
        $region47: #{tpu_custom_call.1} parent=35 // pred_region
          %s582 = smul.u32 4, %s27
          %s584 = ssub.s32 512, 512
          %585 = vsyncadd %s575, %s584
          %s586 = smul.addr %s26, 4
          %s587 = sadd.s32 %s582, %s586
          %s588 = smul.addr %s587, 128
          %s589 = scalar_lea.hbm %s4, %s588
          %s590 = sshll.u32 %s578, 4
          %s591 = int_to_ptr.vmem [resolvable:$true] %s590
          %596 = dma.vmem_to_hbm [thread:$0]  %s591, 512, %s589, %s575, 128, 128, 8
        $region48: #{tpu_custom_call.1} parent=35 // pred_fallthru
          _
      $region36: #{tpu_custom_call.1} parent=5 // pred_fallthru
        _
      %p597 = scmp.le.s32.totalorder 2, %s17
      // Predicated region
      $region49: #{tpu_custom_call.1} parent=5 // pred_check
        %p598 = pneg %p597
      $region50: #{tpu_custom_call.1} parent=5 // pred_check_branch
        %600 = sbr.rel (%p598) target = $region52
      $region51: #{tpu_custom_call.1} parent=5 // pred_region
        %s601 = ssub.s32 %s17, 2
        // Predicated region
        $region53: #{tpu_custom_call.1} parent=51 // pred_check
          %p602 = pneg %p151
        $region54: #{tpu_custom_call.1} parent=51 // pred_check_branch
          %604 = sbr.rel (%p602) target = $region56
        $region55: #{tpu_custom_call.1} parent=51 // pred_region
          %s605 = sand.u32 %s136, 1
          %s606 = scalar_lea.sflag [#allocation4], %s605
          %s607 = sand.u32 %s136, 1
          %s608 = smul.addr %s607, 32
          %s609 = scalar_lea.vmem [#allocation7], %s608
          %610 = dma.done %s606, 512
        $region56: #{tpu_custom_call.1} parent=51 // pred_fallthru
          _
      $region52: #{tpu_custom_call.1} parent=5 // pred_fallthru
        _
    $region6: #{tpu_custom_call.1} parent=1 // loop_footer
      %s21 = sadd.s32 1, %s17
    $region7: #{tpu_custom_call.1} parent=1 // loop_footer_branch
      %16 = sbr.rel target = $region3
    $region8: #{tpu_custom_call.1} parent=1 // loop_exit
      _
    %611 = vsyncpa [#allocation3], 1
    %s612 = scalar_lea.sflag [#allocation3], 1
    %613 = vsyncpa %s612, 1
    %614 = vsyncpa [#allocation6], 1
    %615 = vsyncpa [#allocation4], 1
    %s616 = scalar_lea.sflag [#allocation4], 1
    %617 = vsyncpa %s616, 1

</llo_original>
